<compile_context>
chip_gen: v6e
topology: v6e:2x2x1
jax: 0.10.0
libtpu: 0.0.40
codegen_flags: <defaults>
</compile_context>

<pallas_src>
import functools

import numpy as np

import jax
import jax.numpy as jnp
from jax import lax
from jax.experimental import pallas as pl
from jax.experimental.pallas import tpu as pltpu


# ---------------------------------------------------------------------------
# Kernel 1: fused QKV projection (bf16 MXU inputs, f32 accumulation).
# ---------------------------------------------------------------------------
def _qkv_proj_kernel(x_ref, wqkv_ref, bqkv_ref, q_ref, k_ref, v_ref):
    E = x_ref.shape[1]
    qkv = jnp.dot(x_ref[...], wqkv_ref[...],
                  preferred_element_type=jnp.float32) + bqkv_ref[...]
    q_ref[...] = qkv[:, 0 * E:1 * E].astype(q_ref.dtype)   # q scaling pre-folded
    k_ref[...] = qkv[:, 1 * E:2 * E].astype(k_ref.dtype)
    v_ref[...] = qkv[:, 2 * E:3 * E].astype(v_ref.dtype)


# ---------------------------------------------------------------------------
# Kernel 2: banded flash attention + fused output projection.
#   grid = (batch, q_tile, key_step)
#   sched_ref (SMEM, scalar-prefetched): (nQ, 2) int32 = [k_tile_start, n_k_tiles]
#   bounds_ref: (Sq, 2) int32 per-row allowed-key band [start, end)
# ---------------------------------------------------------------------------
def _banded_attn_kernel(sched_ref, q_ref, k_ref, v_ref, wo_ref, bo_ref,
                        bounds_ref, out_ref, m_ref, l_ref, acc_ref,
                        *, num_heads, head_dim):
    H, D = num_heads, head_dim
    Sq, E = q_ref.shape
    Tk = k_ref.shape[0]
    qi = pl.program_id(1)
    ks = pl.program_id(2)

    # ---- init running softmax state at the first key step of this q tile ----
    @pl.when(ks == 0)
    def _init():
        m_ref[...] = jnp.full(m_ref.shape, -1e30, jnp.float32)
        l_ref[...] = jnp.zeros(l_ref.shape, jnp.float32)
        acc_ref[...] = jnp.zeros(acc_ref.shape, jnp.float32)

    nk = sched_ref[qi, 1]           # number of valid key tiles for this q tile

    # ---- banded online-softmax accumulation (skipped on padded key steps) ----
    @pl.when(ks < nk)
    def _compute():
        k_abs0 = (sched_ref[qi, 0] + ks) * Tk        # absolute key offset of tile

        bounds = bounds_ref[...]                     # (Sq, 2) int32
        band_start = bounds[:, 0:1]                  # (Sq, 1)
        band_end = bounds[:, 1:2]                    # (Sq, 1)
        col = k_abs0 + lax.broadcasted_iota(jnp.int32, (Sq, Tk), 1)
        allowed = (col >= band_start) & (col < band_end)
        # Finite sentinel (not -inf): no NaN risk in the online-softmax updates.
        bias = jnp.where(allowed, 0.0, -1e30).astype(jnp.float32)   # (Sq, Tk)

        q = q_ref[...]          # (Sq, E) bf16, scaling folded in
        kk = k_ref[...]         # (Tk, E) bf16
        vv = v_ref[...]         # (Tk, E) bf16

        # Per-head loop (static unroll); per-head tiles are small (Sq x Tk),
        # so live ranges stay bounded after the banded q/k tiling.
        for h in range(H):
            lo, hi = h * D, (h + 1) * D
            qh = q[:, lo:hi]                         # (Sq, D)
            kh = kk[:, lo:hi]                        # (Tk, D)
            vh = vv[:, lo:hi]                        # (Tk, D)

            # scores = q @ k^T + band bias   (f32)
            s = lax.dot_general(qh, kh, (((1,), (1,)), ((), ())),
                                preferred_element_type=jnp.float32) + bias

            m_prev = m_ref[h]                                        # (Sq, 1)
            m_new = jnp.maximum(m_prev, jnp.max(s, axis=-1, keepdims=True))
            alpha = jnp.exp(m_prev - m_new)
            p = jnp.exp(s - m_new)                                   # (Sq, Tk)
            l_ref[h] = alpha * l_ref[h] + jnp.sum(p, axis=-1, keepdims=True)
            pv = jnp.dot(p.astype(jnp.bfloat16), vh,
                         preferred_element_type=jnp.float32)         # (Sq, D)
            acc_ref[h] = alpha * acc_ref[h] + pv
            m_ref[h] = m_new

    # ---- finalize: deferred normalization + one full-depth out-projection ----
    @pl.when(ks == pl.num_programs(2) - 1)
    def _finalize():
        parts = []
        for h in range(H):
            inv = pl.reciprocal(l_ref[h], approx=True)   # EUP slot, off the VALU
            parts.append(acc_ref[h] * inv)               # (Sq, D) f32
        o = jnp.concatenate(parts, axis=-1)              # (Sq, E), lane-contiguous
        out = jnp.dot(o.astype(jnp.bfloat16), wo_ref[...],
                      preferred_element_type=jnp.float32) + bo_ref[...]
        out_ref[...] = out.astype(out_ref.dtype)


# ---------------------------------------------------------------------------
# Host-side helpers (all static / numpy).
# ---------------------------------------------------------------------------
def _band_bounds_np(seq_len, chunk_size, left_context, right_context):
    """Per-row allowed-key band.  The chunk mask's three intervals always form
    one contiguous band [min(left_start, chunk_start), max(chunk_end, right_end))."""
    i = np.arange(seq_len)
    chunk_start = (i // chunk_size) * chunk_size
    chunk_end = np.minimum(chunk_start + chunk_size, seq_len)
    left_start = np.maximum(i - left_context, 0)
    right_end = np.minimum(i + right_context + 1, seq_len)
    band_start = np.minimum(left_start, chunk_start).astype(np.int32)
    band_end = np.maximum(chunk_end, right_end).astype(np.int32)
    return band_start, band_end


def _pick_tile(total, target):
    """Largest divisor of `total` that is <= target and a multiple of 8;
    falls back to the full extent (always legal for BlockSpec)."""
    if total <= target:
        return total
    for t in range(target, 0, -1):
        if total % t == 0 and t % 8 == 0:
            return t
    return total


# ---------------------------------------------------------------------------
# Wrapper
# ---------------------------------------------------------------------------
def streaming_wav2vec2_attention(
    hidden_states,          # (B, S, E)
    params,                 # torch Linear layout: W is (out, in)
    *,
    num_heads,
    chunk_size=10,
    left_context=25,
    right_context=0,
):
    B, S, E = hidden_states.shape
    H = num_heads
    D = E // H
    scaling = float(D) ** -0.5

    # ---- fused QKV weight (in, out); softmax scaling folded into q ----------
    w_qkv = jnp.concatenate(
        [params["wq"].T * scaling, params["wk"].T, params["wv"].T], axis=1
    ).astype(jnp.bfloat16)                                            # (E, 3E)
    b_qkv = jnp.concatenate(
        [params["bq"] * scaling, params["bk"], params["bv"]]
    ).reshape(1, 3 * E).astype(jnp.float32)
    w_o = params["wo"].T.astype(jnp.bfloat16)                         # (E, E)
    b_o = params["bo"].reshape(1, E).astype(jnp.float32)

    # bf16 activation I/O for the projection (accumulation stays f32 in-kernel)
    x2 = hidden_states.reshape(B * S, E).astype(jnp.bfloat16)

    # ---- kernel 1: fused QKV projection over row tiles ----------------------
    rows = B * S
    Tm = _pick_tile(rows, 512)
    nM = rows // Tm
    qkv_spec = pltpu.PrefetchScalarGridSpec(
        num_scalar_prefetch=0,
        grid=(nM,),
        in_specs=[
            pl.BlockSpec((Tm, E), lambda m: (m, 0)),        # x rows
            pl.BlockSpec((E, 3 * E), lambda m: (0, 0)),     # fused qkv weight
            pl.BlockSpec((1, 3 * E), lambda m: (0, 0)),     # fused qkv bias
        ],
        out_specs=[
            pl.BlockSpec((Tm, E), lambda m: (m, 0)),
            pl.BlockSpec((Tm, E), lambda m: (m, 0)),
            pl.BlockSpec((Tm, E), lambda m: (m, 0)),
        ],
    )
    q, k, v = pl.pallas_call(
        _qkv_proj_kernel,
        out_shape=[jax.ShapeDtypeStruct((rows, E), jnp.bfloat16)] * 3,
        grid_spec=qkv_spec,
        compiler_params=pltpu.CompilerParams(
            dimension_semantics=("parallel",),
            vmem_limit_bytes=48 * 1024 * 1024,
        ),
    )(x2, w_qkv, b_qkv)

    # ---- static banded key schedule -----------------------------------------
    band_start, band_end = _band_bounds_np(S, chunk_size, left_context, right_context)
    Sq = _pick_tile(S, 256)          # keep the MXU M dimension large
    Tk = _pick_tile(S, 128)
    nQ, nK = S // Sq, S // Tk

    ksched = np.zeros((nQ, 2), np.int32)
    for t in range(nQ):
        lo = int(band_start[t * Sq:(t + 1) * Sq].min()) // Tk
        hi = -(-int(band_end[t * Sq:(t + 1) * Sq].max()) // Tk)       # ceil
        ksched[t, 0] = lo
        ksched[t, 1] = hi - lo
    max_k = int(ksched[:, 1].max())
    bounds = np.stack([band_start, band_end], axis=1).astype(np.int32)  # (S, 2)

    # ---- kernel 2: banded attention + fused out-projection ------------------
    def kv_index_map(b, qi, ks, sched):
        kt = jnp.minimum(sched[qi, 0] + ks, nK - 1)   # clamp padded steps (skipped)
        return (b * nK + kt, 0)

    attn_spec = pltpu.PrefetchScalarGridSpec(
        num_scalar_prefetch=1,                        # ksched -> SMEM
        grid=(B, nQ, max_k),
        in_specs=[
            pl.BlockSpec((Sq, E), lambda b, qi, ks, sched: (b * nQ + qi, 0)),  # q
            pl.BlockSpec((Tk, E), kv_index_map),                               # k
            pl.BlockSpec((Tk, E), kv_index_map),                               # v
            pl.BlockSpec((E, E), lambda b, qi, ks, sched: (0, 0)),             # wo
            pl.BlockSpec((1, E), lambda b, qi, ks, sched: (0, 0)),             # bo
            pl.BlockSpec((Sq, 2), lambda b, qi, ks, sched: (qi, 0)),           # bounds
        ],
        out_specs=pl.BlockSpec((Sq, E), lambda b, qi, ks, sched: (b * nQ + qi, 0)),
        scratch_shapes=[
            pltpu.VMEM((H, Sq, 1), jnp.float32),      # running max m
            pltpu.VMEM((H, Sq, 1), jnp.float32),      # running denom l
            pltpu.VMEM((H, Sq, D), jnp.float32),      # unnormalized p@v accumulator
        ],
    )
    kernel = functools.partial(_banded_attn_kernel, num_heads=H, head_dim=D)
    out2 = pl.pallas_call(
        kernel,
        out_shape=jax.ShapeDtypeStruct((rows, E), hidden_states.dtype),
        grid_spec=attn_spec,
        compiler_params=pltpu.CompilerParams(
            dimension_semantics=("parallel", "parallel", "arbitrary"),
            vmem_limit_bytes=48 * 1024 * 1024,
        ),
    )(ksched, q, k, v, w_o, b_o, bounds)

    return out2.reshape(B, S, E)


# ---------------------------------------------------------------------------
# Pure-JAX f32 reference (mirrors the PyTorch forward) for correctness check.
# ---------------------------------------------------------------------------
def make_chunk_attention_mask(seq_len, chunk_size, left_context, right_context):
    i = jnp.arange(seq_len)[:, None]
    j = jnp.arange(seq_len)[None, :]
    chunk_start = (i // chunk_size) * chunk_size
    chunk_end = jnp.minimum(chunk_start + chunk_size, seq_len)
    left_start = jnp.maximum(0, i - left_context)
    right_end = jnp.minimum(seq_len, i + right_context + 1)
    allowed = ((j >= chunk_start) & (j < chunk_end)) \
        | ((j >= left_start) & (j < chunk_start)) \
        | ((j >= chunk_end) & (j < right_end))
    return jnp.where(allowed, 0.0, -jnp.inf).astype(jnp.float32)


def reference_attention(hidden_states, params, *, num_heads, chunk_size,
                        left_context, right_context):
    B, S, E = hidden_states.shape
    D = E // num_heads
    scaling = float(D) ** -0.5

    def linear(x, w, b):  # torch layout: w (out, in)
        return x @ w.T + b

    q = linear(hidden_states, params["wq"], params["bq"]) * scaling
    k = linear(hidden_states, params["wk"], params["bk"])
    v = linear(hidden_states, params["wv"], params["bv"])

    def shape(t):
        return t.reshape(B, S, num_heads, D).transpose(0, 2, 1, 3)

    q, k, v = shape(q), shape(k), shape(v)
    scores = jnp.einsum("bhqd,bhkd->bhqk", q, k)
    mask = make_chunk_attention_mask(S, chunk_size, left_context, right_context)
    scores = scores + mask[None, None]
    probs = jax.nn.softmax(scores, axis=-1)
    out = jnp.einsum("bhqk,bhkd->bhqd", probs, v)
    out = out.transpose(0, 2, 1, 3).reshape(B, S, E)
    return linear(out, params["wo"], params["bo"])


# ---------------------------------------------------------------------------
# Main
# ---------------------------------------------------------------------------
if __name__ == "__main__":
    # Small config consistent with the module: embed_dim=32, num_heads=4,
    # batch=2, seq=16; chunk/context defaults from __init__.
    B, S, E, H = 2, 16, 32, 4
    CHUNK, LCTX, RCTX = 10, 25, 0

    key = jax.random.PRNGKey(0)
    keys = jax.random.split(key, 9)
    scale = 0.1
    params = {
        "wq": scale * jax.random.normal(keys[0], (E, E), jnp.float32),
        "bq": scale * jax.random.normal(keys[1], (E,), jnp.float32),
        "wk": scale * jax.random.normal(keys[2], (E, E), jnp.float32),
        "bk": scale * jax.random.normal(keys[3], (E,), jnp.float32),
        "wv": scale * jax.random.normal(keys[4], (E, E), jnp.float32),
        "bv": scale * jax.random.normal(keys[5], (E,), jnp.float32),
        "wo": scale * jax.random.normal(keys[6], (E, E), jnp.float32),
        "bo": scale * jax.random.normal(keys[7], (E,), jnp.float32),
    }
    hidden_states = jax.random.normal(keys[8], (B, S, E), jnp.float32)

    out = streaming_wav2vec2_attention(
        hidden_states, params, num_heads=H,
        chunk_size=CHUNK, left_context=LCTX, right_context=RCTX,
    )
    out = jax.block_until_ready(out)

    ref = reference_attention(
        hidden_states, params, num_heads=H,
        chunk_size=CHUNK, left_context=LCTX, right_context=RCTX,
    )
    ref = jax.block_until_ready(ref)

    assert out.shape == (B, S, E)
    # Tolerance accounts for bf16 q/k/v storage, bf16 MXU inputs, and the
    # approx reciprocal vs. the f32 reference (typical |err| ~ 1e-3 here).
    max_err = float(jnp.max(jnp.abs(out - ref)))
    assert jnp.allclose(out, ref, rtol=3e-2, atol=3e-2), f"max abs err = {max_err}"

    print("KERNEL_OK")
</pallas_src>

<mosaic_0001>
module attributes {stable_mosaic.version = 11 : i64} {
  func.func @_qkv_proj_kernel(%arg0: i32, %arg1: memref<32x32xbf16, #tpu.memory_space<vmem>>, %arg2: memref<32x96xbf16, #tpu.memory_space<vmem>>, %arg3: memref<1x96xf32, #tpu.memory_space<vmem>>, %arg4: memref<32x32xbf16, #tpu.memory_space<vmem>>, %arg5: memref<32x32xbf16, #tpu.memory_space<vmem>>, %arg6: memref<32x32xbf16, #tpu.memory_space<vmem>>) attributes {dimension_semantics = [#tpu.dimension_semantics<parallel>], iteration_bounds = array<i64: 1>, scalar_prefetch = 0 : i64, scratch_operands = 0 : i64, tpu.core_type = #tpu.core_type<tc>, window_params = [{transform_indices = @transform_0, window_bounds = array<i64: 32, 32>}, {pipeline_mode = #tpu.pipeline_mode<synchronous>, transform_indices = @transform_1, window_bounds = array<i64: 32, 96>}, {pipeline_mode = #tpu.pipeline_mode<synchronous>, transform_indices = @transform_2, window_bounds = array<i64: 1, 96>}, {transform_indices = @transform_3, window_bounds = array<i64: 32, 32>}, {transform_indices = @transform_4, window_bounds = array<i64: 32, 32>}, {transform_indices = @transform_5, window_bounds = array<i64: 32, 32>}]} {
    %c0 = arith.constant 0 : index
    %c0_0 = arith.constant 0 : index
    %0 = vector.load %arg1[%c0, %c0_0] : memref<32x32xbf16, #tpu.memory_space<vmem>>, vector<32x32xbf16>
    %c0_1 = arith.constant 0 : index
    %c0_2 = arith.constant 0 : index
    %1 = vector.load %arg2[%c0_1, %c0_2] : memref<32x96xbf16, #tpu.memory_space<vmem>>, vector<32x96xbf16>
    %cst = arith.constant dense<0.000000e+00> : vector<32x96xf32>
    %2 = tpu.matmul %0, %1, %cst {dimension_numbers = #tpu.dot_dimension_numbers<[1], [0], [0], [1], [0, 0, 1, 1], [], []>} : vector<32x32xbf16>, vector<32x96xbf16>, vector<32x96xf32> -> vector<32x96xf32>
    %c0_3 = arith.constant 0 : index
    %c0_4 = arith.constant 0 : index
    %3 = vector.load %arg3[%c0_3, %c0_4] : memref<1x96xf32, #tpu.memory_space<vmem>>, vector<1x96xf32>
    %4 = vector.broadcast %3 : vector<1x96xf32> to vector<32x96xf32>
    %5 = arith.addf %2, %4 : vector<32x96xf32>
    %6 = vector.extract_strided_slice %5 {offsets = [0, 0], sizes = [32, 32], strides = [1, 1]} : vector<32x96xf32> to vector<32x32xf32>
    %7 = arith.truncf %6 : vector<32x32xf32> to vector<32x32xbf16>
    %c0_5 = arith.constant 0 : index
    %c0_6 = arith.constant 0 : index
    %8 = vector.load %arg4[%c0_5, %c0_6] : memref<32x32xbf16, #tpu.memory_space<vmem>>, vector<32x32xbf16>
    tpu.vector_store %arg4[%c0_5, %c0_6], %7 {strides = array<i32>} : memref<32x32xbf16, #tpu.memory_space<vmem>>, vector<32x32xbf16>,
    %9 = vector.extract_strided_slice %5 {offsets = [0, 32], sizes = [32, 32], strides = [1, 1]} : vector<32x96xf32> to vector<32x32xf32>
    %10 = arith.truncf %9 : vector<32x32xf32> to vector<32x32xbf16>
    %c0_7 = arith.constant 0 : index
    %c0_8 = arith.constant 0 : index
    %11 = vector.load %arg5[%c0_7, %c0_8] : memref<32x32xbf16, #tpu.memory_space<vmem>>, vector<32x32xbf16>
    tpu.vector_store %arg5[%c0_7, %c0_8], %10 {strides = array<i32>} : memref<32x32xbf16, #tpu.memory_space<vmem>>, vector<32x32xbf16>,
    %12 = vector.extract_strided_slice %5 {offsets = [0, 64], sizes = [32, 32], strides = [1, 1]} : vector<32x96xf32> to vector<32x32xf32>
    %13 = arith.truncf %12 : vector<32x32xf32> to vector<32x32xbf16>
    %c0_9 = arith.constant 0 : index
    %c0_10 = arith.constant 0 : index
    %14 = vector.load %arg6[%c0_9, %c0_10] : memref<32x32xbf16, #tpu.memory_space<vmem>>, vector<32x32xbf16>
    tpu.vector_store %arg6[%c0_9, %c0_10], %13 {strides = array<i32>} : memref<32x32xbf16, #tpu.memory_space<vmem>>, vector<32x32xbf16>,
    return
  }
  func.func @transform_0(%arg0: i32) -> (i32, i32) {
    %c0_i32 = arith.constant 0 : i32
    %c0_i32_0 = arith.constant 0 : i32
    return %arg0, %c0_i32 : i32, i32
  }
  func.func @transform_1(%arg0: i32) -> (i32, i32) {
    %c0_i32 = arith.constant 0 : i32
    %c0_i32_0 = arith.constant 0 : i32
    %c0_i32_1 = arith.constant 0 : i32
    return %c0_i32, %c0_i32_0 : i32, i32
  }
  func.func @transform_2(%arg0: i32) -> (i32, i32) {
    %c0_i32 = arith.constant 0 : i32
    %c0_i32_0 = arith.constant 0 : i32
    %c0_i32_1 = arith.constant 0 : i32
    return %c0_i32, %c0_i32_0 : i32, i32
  }
  func.func @transform_3(%arg0: i32) -> (i32, i32) {
    %c0_i32 = arith.constant 0 : i32
    %c0_i32_0 = arith.constant 0 : i32
    return %arg0, %c0_i32 : i32, i32
  }
  func.func @transform_4(%arg0: i32) -> (i32, i32) {
    %c0_i32 = arith.constant 0 : i32
    %c0_i32_0 = arith.constant 0 : i32
    return %arg0, %c0_i32 : i32, i32
  }
  func.func @transform_5(%arg0: i32) -> (i32, i32) {
    %c0_i32 = arith.constant 0 : i32
    %c0_i32_0 = arith.constant 0 : i32
    return %arg0, %c0_i32 : i32, i32
  }
}

</mosaic_0001>

<llo_original>
// kernel: tpu_custom_call.1
$region0: #{tpu_custom_call.1}
  #allocation0 [shape = 'u32[]', space=smem, size = 0x4, offset = 0x4, fixed_abs, tag = 'smem constant byte address 0x4 - core index']
  #allocation1 [shape = 'u32[144,128]{1,0:T(1,128)}', space=vmem, size = 0x12000, scoped, tag = 'internal scratch']
  %s0 = inlined_call_operand.hbm [shape: bf16[32,32], index: 0, kind: input, shape index: {}]
  %s1 = inlined_call_operand.hbm [shape: bf16[32,96], index: 1, kind: input, shape index: {}]
  %s2 = inlined_call_operand.vmem [shape: f32[1,96], index: 2, kind: input, shape index: {}]
  %s3 = inlined_call_operand.hbm [shape: bf16[32,32], index: 3, kind: output, shape index: {0}]
  %s4 = inlined_call_operand.hbm [shape: bf16[32,32], index: 4, kind: output, shape index: {1}]
  %s5 = inlined_call_operand.hbm [shape: bf16[32,32], index: 5, kind: output, shape index: {2}]
  %6 = xla_tuple %s3, %s4, %s5
  %s7 = sld [smem:[#allocation0]]
  $region46: #{tpu_custom_call.1} parent=0
    _
  %s9 = ssub.s32 1, %s7
  %s10 = scalar_select 0, %s9, %s7
  $region1: #{tpu_custom_call.1} parent=0
    #allocation2 [shape = 'u8[8192]{0}', space=vmem, size = 0x2000, scoped, tag = 'input window, operand 0, single buffered']
    #allocation3 [shape = 's32[1]{0}', space=sflag, size = 0x4, scoped, tag = 'scoped memory for tpu_custom_call.1']
    #allocation4 [shape = 's32[1]{0}', space=sflag, size = 0x4, scoped, tag = 'scoped memory for tpu_custom_call.1']
    #allocation5 [shape = 'u8[8192]{0}', space=vmem, size = 0x2000, scoped, tag = 'input window, operand 1, single buffered']
    #allocation6 [shape = 's32[1]{0}', space=sflag, size = 0x4, scoped, tag = 'scoped memory for tpu_custom_call.1']
    #allocation7 [shape = 'u8[8192]{0}', space=vmem, size = 0x2000, scoped, tag = 'output window, operand 0, single buffered']
    #allocation8 [shape = 'u8[8192]{0}', space=vmem, size = 0x2000, scoped, tag = 'output window, operand 1, single buffered']
    #allocation9 [shape = 's32[1]{0}', space=sflag, size = 0x4, scoped, tag = 'scoped memory for tpu_custom_call.1']
    #allocation10 [shape = 'u8[8192]{0}', space=vmem, size = 0x2000, scoped, tag = 'output window, operand 2, single buffered']
    %11 = vsyncpa [#allocation3], 0
    %12 = vsyncpa [#allocation6], 0
    %13 = vsyncpa [#allocation4], 0
    %14 = vsyncpa [#allocation9], 0
    // Predicated region
    $region2: #{tpu_custom_call.1} parent=1 // pred_check
      _
    $region3: #{tpu_custom_call.1} parent=1 // pred_check_branch
      %16 = sbr.rel (0) target = $region5
    $region4: #{tpu_custom_call.1} parent=1 // pred_region
      %s18 = ssub.s32 256, 256
      %19 = vsyncadd [#allocation3], %s18
      %s20 = sshll.u32 [#allocation2], 4
      %s21 = int_to_ptr.vmem [resolvable:$true] %s20
      %26 = dma.hbm_to_vmem [thread:$0]  %s0, 256, %s21, [#allocation3], 64, 64, 4
    $region5: #{tpu_custom_call.1} parent=1 // pred_fallthru
      _
    // Predicated region
    $region6: #{tpu_custom_call.1} parent=1 // pred_check
      _
    $region7: #{tpu_custom_call.1} parent=1 // pred_check_branch
      %28 = sbr.rel (0) target = $region9
    $region8: #{tpu_custom_call.1} parent=1 // pred_region
      %s30 = ssub.s32 256, 256
      %31 = vsyncadd [#allocation6], %s30
      %s32 = sshll.u32 [#allocation5], 4
      %s33 = int_to_ptr.vmem [resolvable:$true] %s32
      %38 = dma.hbm_to_vmem [thread:$0]  %s1, 256, %s33, [#allocation6], 64, 64, 4
    $region9: #{tpu_custom_call.1} parent=1 // pred_fallthru
      _
    // Predicated region
    $region10: #{tpu_custom_call.1} parent=1 // pred_check
      _
    $region11: #{tpu_custom_call.1} parent=1 // pred_check_branch
      %40 = sbr.rel (0) target = $region13
    $region12: #{tpu_custom_call.1} parent=1 // pred_region
      _
    $region13: #{tpu_custom_call.1} parent=1 // pred_fallthru
      _
    // Predicated region
    $region14: #{tpu_custom_call.1} parent=1 // pred_check
      _
    $region15: #{tpu_custom_call.1} parent=1 // pred_check_branch
      %42 = sbr.rel (0) target = $region17
    $region16: #{tpu_custom_call.1} parent=1 // pred_region
      %43 = dma.done [#allocation3], 256
    $region17: #{tpu_custom_call.1} parent=1 // pred_fallthru
      _
    // Predicated region
    $region18: #{tpu_custom_call.1} parent=1 // pred_check
      _
    $region19: #{tpu_custom_call.1} parent=1 // pred_check_branch
      %45 = sbr.rel (0) target = $region21
    $region20: #{tpu_custom_call.1} parent=1 // pred_region
      %46 = dma.done [#allocation6], 256
    $region21: #{tpu_custom_call.1} parent=1 // pred_fallthru
      _
    %v48 = vld [vmem:[#allocation2] sm:$0xf]
    %v49 = vld [vmem:[#allocation2 + $0x4] sm:$0xf]
    %v50 = vld [vmem:[#allocation2 + $0x8] sm:$0xf]
    %v51 = vld [vmem:[#allocation2 + $0xc] sm:$0xf]
    %v52 = vld [vmem:[#allocation5] sm:$0xf]
    %v53 = vld [vmem:[#allocation5 + $0x4] sm:$0xf]
    %v54 = vld [vmem:[#allocation5 + $0x8] sm:$0xf]
    %v55 = vld [vmem:[#allocation5 + $0xc] sm:$0xf]
    %v56 = vld [vmem:[%s2] sm:$0x1]
    %v58 = vlaneseq
    %v59 = vshrl.u32 %v58, 7
    %v60 = vsub.s32 0, %v59
    %v61 = vrot.slane %v56, %v60
    %v67 = vunpack.c.l.b16 %v48
    %v68 = vunpack.c.l.b16 %v49
    %v69 = vunpack.c.l.b16 %v50
    %v70 = vunpack.c.l.b16 %v51
    %v71 = vpack.c.b16 %v68, %v67
    %v72 = vpack.c.b16 %v70, %v69
    %v77 = vunpack.c.l.b16 %v52
    %v78 = vunpack.c.l.b16 %v53
    %v79 = vunpack.c.l.b16 %v54
    %v80 = vunpack.c.l.b16 %v55
    %v81 = vpack.c.b16 %v78, %v77
    %v82 = vpack.c.b16 %v80, %v79
    %vm85 = vcmask 261120
    %v87 = vsel %vm85, %v71, 0
    %v90 = vsel %vm85, %v72, 0
    %92 = vmatprep.subr.bf16.mxu0 0
    %93 = vmatpush1.bf16.msra.mxu0 0
    %94 = vmatprep.subr.bf16.mxu0 0
    %95 = vmatpush1.bf16.msra.mxu0 0
    %96 = vmatprep.subr.bf16.mxu0 0
    %97 = vmatpush1.bf16.msra.mxu0 0
    %98 = vmatprep.subr.bf16.mxu0 0
    %99 = vmatpush1.bf16.msra.mxu0 0
    %100 = vmatprep.subr.bf16.mxu0 0
    %101 = vmatpush1.bf16.msra.mxu0 0
    %102 = vmatprep.subr.bf16.mxu0 0
    %103 = vmatpush1.bf16.msra.mxu0 0
    %104 = vmatprep.subr.bf16.mxu0 0
    %105 = vmatpush1.bf16.msra.mxu0 %v82
    %106 = vmatprep.subr.bf16.mxu0 0
    %107 = vmatpush1.bf16.msra.mxu0 %v81
    %108 = vmatprep.subr.bf16.mxu0 0
    %109 = vmatpush2.bf16.msra.mxu0 0
    %110 = vmatprep.subr.bf16.mxu0 0
    %111 = vmatpush2.bf16.msra.mxu0 0
    %112 = vmatprep.subr.bf16.mxu0 0
    %113 = vmatpush2.bf16.msra.mxu0 0
    %114 = vmatprep.subr.bf16.mxu0 0
    %115 = vmatpush2.bf16.msra.mxu0 0
    %116 = vmatprep.subr.bf16.mxu0 0
    %117 = vmatpush2.bf16.msra.mxu0 0
    %118 = vmatprep.subr.bf16.mxu0 0
    %119 = vmatpush2.bf16.msra.mxu0 0
    %120 = vmatprep.subr.bf16.mxu0 0
    %121 = vmatpush2.bf16.msra.mxu0 0
    %122 = vmatprep.subr.bf16.mxu0 0
    %123 = vmatpush2.bf16.msra.mxu0 0
    %124 = vmatprep.mubr.bf16.mxu0 0
    %125 = vmatmul.mubr.bf16.gmra.mxu0 %v87
    %v126 = vpop.f32.mrf.mxu0
    %v127 = vadd.f32 %v61, %v126
    %v128 = vpop.f32.mrf.mxu0
    %v129 = vpop.f32.mrf.mxu0
    %v130 = vadd.f32 %v61, %v129
    %v131 = vpop.f32.mrf.mxu0
    %132 = vmatprep.mubr.bf16.mxu0 0
    %133 = vmatmul.mubr.bf16.gmra.mxu0 %v90
    %v134 = vpop.f32.mrf.mxu0
    %v135 = vadd.f32 %v61, %v134
    %v136 = vpop.f32.mrf.mxu0
    %v137 = vpop.f32.mrf.mxu0
    %v138 = vadd.f32 %v61, %v137
    %v139 = vpop.f32.mrf.mxu0
    %140 = vdwg.mxu0
    %v141 = vpack.c.bf16 %v130, %v127
    %v142 = vpack.c.bf16 %v138, %v135
    %v145 = vunpack.c.l.b16 %v141
    %v146 = vunpack.c.h.b16 %v141
    %v147 = vunpack.c.l.b16 %v142
    %v148 = vunpack.c.h.b16 %v142
    %v149 = vpack.c.b16 %v145, %v145
    %v150 = vpack.c.b16 %v146, %v146
    %v151 = vpack.c.b16 %v147, %v147
    %v152 = vpack.c.b16 %v148, %v148
    %vm157 = vcmask 257024
    %158 = vst.msk [vmem:[#allocation7] sm:$0xf] %vm157, %v149
    %159 = vst.msk [vmem:[#allocation7 + $0x4] sm:$0xf] %vm157, %v150
    %160 = vst.msk [vmem:[#allocation7 + $0x8] sm:$0xf] %vm157, %v151
    %161 = vst.msk [vmem:[#allocation7 + $0xc] sm:$0xf] %vm157, %v152
    %162 = vrot.lane.b32.xlu0 %v149, 96
    %v163 = vpop.permute.xlu0 %162
    %164 = vrot.lane.b32.xlu0 %v150, 96
    %v165 = vpop.permute.xlu0 %164
    %166 = vrot.lane.b32.xlu0 %v151, 96
    %v167 = vpop.permute.xlu0 %166
    %168 = vrot.lane.b32.xlu0 %v152, 96
    %v169 = vpop.permute.xlu0 %168
    %174 = vst.msk [vmem:[#allocation8] sm:$0xf] %vm157, %v163
    %175 = vst.msk [vmem:[#allocation8 + $0x4] sm:$0xf] %vm157, %v165
    %176 = vst.msk [vmem:[#allocation8 + $0x8] sm:$0xf] %vm157, %v167
    %177 = vst.msk [vmem:[#allocation8 + $0xc] sm:$0xf] %vm157, %v169
    %178 = vrot.lane.b32.xlu0 %v149, 64
    %v179 = vpop.permute.xlu0 %178
    %180 = vrot.lane.b32.xlu0 %v150, 64
    %v181 = vpop.permute.xlu0 %180
    %182 = vrot.lane.b32.xlu0 %v151, 64
    %v183 = vpop.permute.xlu0 %182
    %184 = vrot.lane.b32.xlu0 %v152, 64
    %v185 = vpop.permute.xlu0 %184
    %190 = vst.msk [vmem:[#allocation10] sm:$0xf] %vm157, %v179
    %191 = vst.msk [vmem:[#allocation10 + $0x4] sm:$0xf] %vm157, %v181
    %192 = vst.msk [vmem:[#allocation10 + $0x8] sm:$0xf] %vm157, %v183
    %193 = vst.msk [vmem:[#allocation10 + $0xc] sm:$0xf] %vm157, %v185
    // Predicated region
    $region22: #{tpu_custom_call.1} parent=1 // pred_check
      _
    $region23: #{tpu_custom_call.1} parent=1 // pred_check_branch
      %195 = sbr.rel (0) target = $region25
    $region24: #{tpu_custom_call.1} parent=1 // pred_region
      %s197 = ssub.s32 256, 256
      %198 = vsyncadd [#allocation4], %s197
      %s199 = sshll.u32 [#allocation7], 4
      %s200 = int_to_ptr.vmem [resolvable:$true] %s199
      %205 = dma.vmem_to_hbm [thread:$0]  %s200, 256, %s3, [#allocation4], 64, 64, 4
    $region25: #{tpu_custom_call.1} parent=1 // pred_fallthru
      _
    // Predicated region
    $region26: #{tpu_custom_call.1} parent=1 // pred_check
      _
    $region27: #{tpu_custom_call.1} parent=1 // pred_check_branch
      %207 = sbr.rel (0) target = $region29
    $region28: #{tpu_custom_call.1} parent=1 // pred_region
      %s209 = ssub.s32 256, 256
      %210 = vsyncadd [#allocation9], %s209
      %s211 = sshll.u32 [#allocation8], 4
      %s212 = int_to_ptr.vmem [resolvable:$true] %s211
      %217 = dma.vmem_to_hbm [thread:$0]  %s212, 256, %s4, [#allocation9], 64, 64, 4
    $region29: #{tpu_custom_call.1} parent=1 // pred_fallthru
      _
    // Predicated region
    $region30: #{tpu_custom_call.1} parent=1 // pred_check
      _
    $region31: #{tpu_custom_call.1} parent=1 // pred_check_branch
      %219 = sbr.rel (0) target = $region33
    $region32: #{tpu_custom_call.1} parent=1 // pred_region
      %s221 = ssub.s32 256, 256
      %222 = vsyncadd [#allocation9], %s221
      %s223 = sshll.u32 [#allocation10], 4
      %s224 = int_to_ptr.vmem [resolvable:$true] %s223
      %229 = dma.vmem_to_hbm [thread:$0]  %s224, 256, %s5, [#allocation9], 64, 64, 4
    $region33: #{tpu_custom_call.1} parent=1 // pred_fallthru
      _
    // Predicated region
    $region34: #{tpu_custom_call.1} parent=1 // pred_check
      _
    $region35: #{tpu_custom_call.1} parent=1 // pred_check_branch
      %231 = sbr.rel (0) target = $region37
    $region36: #{tpu_custom_call.1} parent=1 // pred_region
      %232 = dma.done [#allocation4], 256
    $region37: #{tpu_custom_call.1} parent=1 // pred_fallthru
      _
    // Predicated region
    $region38: #{tpu_custom_call.1} parent=1 // pred_check
      _
    $region39: #{tpu_custom_call.1} parent=1 // pred_check_branch
      %234 = sbr.rel (0) target = $region41
    $region40: #{tpu_custom_call.1} parent=1 // pred_region
      %235 = dma.done [#allocation9], 256
    $region41: #{tpu_custom_call.1} parent=1 // pred_fallthru
      _
    // Predicated region
    $region42: #{tpu_custom_call.1} parent=1 // pred_check
      _
    $region43: #{tpu_custom_call.1} parent=1 // pred_check_branch
      %237 = sbr.rel (0) target = $region45
    $region44: #{tpu_custom_call.1} parent=1 // pred_region
      %238 = dma.done [#allocation9], 256
    $region45: #{tpu_custom_call.1} parent=1 // pred_fallthru
      _
    %239 = vsyncpa [#allocation3], 1
    %240 = vsyncpa [#allocation6], 1
    %241 = vsyncpa [#allocation4], 1
    %242 = vsyncpa [#allocation9], 1

</llo_original>
